<compile_context>
chip_gen: v7x
topology: tpu7x:2x2x1
jax: 0.10.0
libtpu: 0.0.40
codegen_flags: <defaults>
</compile_context>

<pallas_src>
import functools
import math

import jax
import jax.numpy as jnp
from jax.experimental import pallas as pl
from jax.experimental.pallas import tpu as pltpu

# ----------------------------- config -----------------------------
VOCAB = 128
TYPE_VOCAB = 2
MAX_POS = 64
HIDDEN = 768
NUM_HEADS = 12
HEAD_DIM = HIDDEN // NUM_HEADS
NUM_LAYERS = 2
INTERMEDIATE = 3072
LN_EPS = 1e-12


# ----------------------------- kernels -----------------------------
def _dense_kernel(x_ref, w_ref, b_ref, o_ref, *, activation):
    """out = act(x @ w + b) for one N-tile.  Weights are bf16, math in f32."""
    acc = jnp.dot(x_ref[...].astype(jnp.bfloat16), w_ref[...],
                  preferred_element_type=jnp.float32)
    acc = acc + b_ref[...]
    if activation == "gelu":
        acc = 0.5 * acc * (1.0 + jnp.tanh(
            0.7978845608028654 * (acc + 0.044715 * acc * acc * acc)))
    o_ref[...] = acc.astype(o_ref.dtype)


def _dense_res_ln_kernel(x_ref, w_ref, b_ref, r_ref, g_ref, beta_ref, o_ref,
                         *, eps):
    """out = LayerNorm(x @ w + b + residual) — dense epilogue fusion."""
    acc = jnp.dot(x_ref[...].astype(jnp.bfloat16), w_ref[...],
                  preferred_element_type=jnp.float32)
    y = acc + b_ref[...] + r_ref[...]
    mu = jnp.mean(y, axis=-1, keepdims=True)
    var = jnp.mean((y - mu) * (y - mu), axis=-1, keepdims=True)
    yn = (y - mu) * jax.lax.rsqrt(var + eps)
    o_ref[...] = (yn * g_ref[...] + beta_ref[...]).astype(o_ref.dtype)


def _ln_kernel(x_ref, g_ref, b_ref, o_ref, *, eps):
    """Plain LayerNorm over the hidden axis (embedding LN, no residual)."""
    x = x_ref[...]
    mu = jnp.mean(x, axis=-1, keepdims=True)
    var = jnp.mean((x - mu) * (x - mu), axis=-1, keepdims=True)
    y = (x - mu) * jax.lax.rsqrt(var + eps)
    o_ref[...] = (y * g_ref[...] + b_ref[...]).astype(o_ref.dtype)


def _attn_kernel(qkv_ref, bias_ref, o_ref, *, scale, num_heads, head_dim,
                 hidden):
    """Self-attention for one batch element; all heads handled in-kernel.

    qkv_ref: (S, 3*hidden) fused projections; bias_ref: (1, 1, S) additive mask.
    Head split is done with static lane slices; output store is 768-lane dense.
    """
    qkv = qkv_ref[...]            # (S, 3*hidden) f32
    bias = bias_ref[0]            # (1, S)
    ctxs = []
    for h in range(num_heads):
        lo = h * head_dim
        q = qkv[:, lo:lo + head_dim]
        k = qkv[:, hidden + lo:hidden + lo + head_dim]
        v = qkv[:, 2 * hidden + lo:2 * hidden + lo + head_dim]
        s = jax.lax.dot_general(q, k, (((1,), (1,)), ((), ())),
                                preferred_element_type=jnp.float32)
        s = s * scale + bias
        m = jnp.max(s, axis=-1, keepdims=True)
        e = jnp.exp(s - m)
        p = e * pl.reciprocal(jnp.sum(e, axis=-1, keepdims=True), approx=False)
        ctxs.append(jnp.dot(p, v, preferred_element_type=jnp.float32))
    o_ref[...] = jnp.concatenate(ctxs, axis=-1).astype(o_ref.dtype)


def _pool_head_kernel(cls_ref, pw_ref, pb_ref, w1_ref, b1_ref, w2_ref, b2_ref,
                      o_ref):
    """BERT pooler (tanh) -> linear1 -> linear2 -> softmax over dim=0."""
    pooled = jnp.dot(cls_ref[...].astype(jnp.bfloat16), pw_ref[...],
                     preferred_element_type=jnp.float32)
    pooled = jnp.tanh(pooled + pb_ref[...])                     # (B, 768)
    h = jnp.dot(pooled.astype(jnp.bfloat16), w1_ref[...],
                preferred_element_type=jnp.float32) + b1_ref[...]   # (B, 128)
    logits = jnp.dot(h, w2_ref[...],
                     preferred_element_type=jnp.float32) + b2_ref[...]  # (B,1)
    m = jnp.max(logits, axis=0, keepdims=True)
    e = jnp.exp(logits - m)
    o_ref[...] = (e / jnp.sum(e, axis=0, keepdims=True)).astype(o_ref.dtype)


# ----------------------------- wrappers -----------------------------
def _pick_tn(n):
    for t in (1024, 768, 512, 256, 128):
        if n % t == 0:
            return t
    return n


def dense(x, w, b, activation="none"):
    """act(x @ w + b), N-tiled.  w is bf16, x/bias f32, output f32."""
    M, K = x.shape
    _, N = w.shape
    tn = _pick_tn(N)
    return pl.pallas_call(
        functools.partial(_dense_kernel, activation=activation),
        out_shape=jax.ShapeDtypeStruct((M, N), jnp.float32),
        grid=(N // tn,),
        in_specs=[
            pl.BlockSpec((M, K), lambda j: (0, 0)),
            pl.BlockSpec((K, tn), lambda j: (0, j)),
            pl.BlockSpec((1, tn), lambda j: (0, j)),
        ],
        out_specs=pl.BlockSpec((M, tn), lambda j: (0, j)),
        compiler_params=pltpu.CompilerParams(
            dimension_semantics=("parallel",)),
    )(x, w, b.reshape(1, N))


def dense_res_ln(x, w, b, res, gamma, beta, eps=LN_EPS):
    """LayerNorm(x @ w + b + res) in a single kernel (N=768 single block)."""
    M, K = x.shape
    _, N = w.shape
    return pl.pallas_call(
        functools.partial(_dense_res_ln_kernel, eps=eps),
        out_shape=jax.ShapeDtypeStruct((M, N), jnp.float32),
        grid=(1,),
        in_specs=[
            pl.BlockSpec((M, K), lambda i: (0, 0)),
            pl.BlockSpec((K, N), lambda i: (0, 0)),
            pl.BlockSpec((1, N), lambda i: (0, 0)),
            pl.BlockSpec((M, N), lambda i: (0, 0)),
            pl.BlockSpec((1, N), lambda i: (0, 0)),
            pl.BlockSpec((1, N), lambda i: (0, 0)),
        ],
        out_specs=pl.BlockSpec((M, N), lambda i: (0, 0)),
        compiler_params=pltpu.CompilerParams(
            dimension_semantics=("arbitrary",)),
    )(x, w, b.reshape(1, N), res, gamma.reshape(1, N), beta.reshape(1, N))


def layer_norm(x, gamma, beta, eps=LN_EPS):
    M, Hd = x.shape
    return pl.pallas_call(
        functools.partial(_ln_kernel, eps=eps),
        out_shape=jax.ShapeDtypeStruct((M, Hd), jnp.float32),
        grid=(1,),
        in_specs=[
            pl.BlockSpec((M, Hd), lambda i: (0, 0)),
            pl.BlockSpec((1, Hd), lambda i: (0, 0)),
            pl.BlockSpec((1, Hd), lambda i: (0, 0)),
        ],
        out_specs=pl.BlockSpec((M, Hd), lambda i: (0, 0)),
        compiler_params=pltpu.CompilerParams(
            dimension_semantics=("arbitrary",)),
    )(x, gamma.reshape(1, Hd), beta.reshape(1, Hd))


def attention(qkv, bias, B, S):
    """qkv: (B*S, 3*HIDDEN) fused projections; bias: (B, 1, S) additive mask."""
    scale = 1.0 / math.sqrt(HEAD_DIM)
    return pl.pallas_call(
        functools.partial(_attn_kernel, scale=scale, num_heads=NUM_HEADS,
                          head_dim=HEAD_DIM, hidden=HIDDEN),
        out_shape=jax.ShapeDtypeStruct((B * S, HIDDEN), jnp.float32),
        grid=(B,),
        in_specs=[
            pl.BlockSpec((S, 3 * HIDDEN), lambda b: (b, 0)),
            pl.BlockSpec((1, 1, S), lambda b: (b, 0, 0)),
        ],
        out_specs=pl.BlockSpec((S, HIDDEN), lambda b: (b, 0)),
        compiler_params=pltpu.CompilerParams(
            dimension_semantics=("parallel",)),
    )(qkv, bias)


def pool_head(cls_tok, pool_w, pool_b, w1, b1, w2, b2):
    B, D = cls_tok.shape
    return pl.pallas_call(
        _pool_head_kernel,
        out_shape=jax.ShapeDtypeStruct((B, 1), jnp.float32),
        grid=(1,),
        in_specs=[
            pl.BlockSpec((B, D), lambda i: (0, 0)),
            pl.BlockSpec(pool_w.shape, lambda i: (0, 0)),
            pl.BlockSpec((1, D), lambda i: (0, 0)),
            pl.BlockSpec(w1.shape, lambda i: (0, 0)),
            pl.BlockSpec((1, w1.shape[1]), lambda i: (0, 0)),
            pl.BlockSpec(w2.shape, lambda i: (0, 0)),
            pl.BlockSpec((1, 1), lambda i: (0, 0)),
        ],
        out_specs=pl.BlockSpec((B, 1), lambda i: (0, 0)),
        compiler_params=pltpu.CompilerParams(
            dimension_semantics=("arbitrary",)),
    )(cls_tok, pool_w, pool_b.reshape(1, D), w1, b1.reshape(1, -1), w2,
      b2.reshape(1, 1))


# ----------------------------- model -----------------------------
def init_params(key):
    keys = iter(jax.random.split(key, 128))

    def nrm(shape, dtype=jnp.float32):
        return (0.02 * jax.random.normal(next(keys), shape,
                                         jnp.float32)).astype(dtype)

    params = {
        "word_emb": nrm((VOCAB, HIDDEN)),
        "pos_emb": nrm((MAX_POS, HIDDEN)),
        "type_emb": nrm((TYPE_VOCAB, HIDDEN)),
        "emb_ln_g": jnp.ones((HIDDEN,), jnp.float32),
        "emb_ln_b": jnp.zeros((HIDDEN,), jnp.float32),
        "layers": [],
        # matmul weights in bf16 (HBM-bandwidth bound), biases/LN in f32
        "pool_w": nrm((HIDDEN, HIDDEN), jnp.bfloat16),
        "pool_b": jnp.zeros((HIDDEN,), jnp.float32),
        "w1": nrm((HIDDEN, 128), jnp.bfloat16),
        "b1": jnp.zeros((128,), jnp.float32),
        "w2": nrm((128, 1), jnp.float32),
        "b2": jnp.zeros((1,), jnp.float32),
    }
    for _ in range(NUM_LAYERS):
        params["layers"].append({
            # fused Q|K|V projection weight / bias
            "wqkv": nrm((HIDDEN, 3 * HIDDEN), jnp.bfloat16),
            "bqkv": jnp.zeros((3 * HIDDEN,), jnp.float32),
            "wo": nrm((HIDDEN, HIDDEN), jnp.bfloat16),
            "bo": jnp.zeros((HIDDEN,), jnp.float32),
            "ln1_g": jnp.ones((HIDDEN,), jnp.float32),
            "ln1_b": jnp.zeros((HIDDEN,), jnp.float32),
            "wi": nrm((HIDDEN, INTERMEDIATE), jnp.bfloat16),
            "bi": jnp.zeros((INTERMEDIATE,), jnp.float32),
            "wo2": nrm((INTERMEDIATE, HIDDEN), jnp.bfloat16),
            "bo2": jnp.zeros((HIDDEN,), jnp.float32),
            "ln2_g": jnp.ones((HIDDEN,), jnp.float32),
            "ln2_b": jnp.zeros((HIDDEN,), jnp.float32),
        })
    return params


def riddle_forward(params, input_ids, token_type_ids, attention_mask):
    B, S = input_ids.shape

    # --- embeddings (gather is XLA glue; LN is a Pallas kernel) ---
    emb = (jnp.take(params["word_emb"], input_ids, axis=0)
           + params["pos_emb"][None, :S, :]
           + jnp.take(params["type_emb"], token_type_ids, axis=0))
    x = emb.reshape(B * S, HIDDEN)
    x = layer_norm(x, params["emb_ln_g"], params["emb_ln_b"])

    # additive attention bias, shape (B, 1, S)
    bias = ((1.0 - attention_mask.astype(jnp.float32)) * -1e9).reshape(B, 1, S)

    # --- transformer encoder ---
    for lp in params["layers"]:
        qkv = dense(x, lp["wqkv"], lp["bqkv"])                 # (B*S, 2304)
        ctx = attention(qkv, bias, B, S)                       # (B*S, 768)
        x = dense_res_ln(ctx, lp["wo"], lp["bo"], x,
                         lp["ln1_g"], lp["ln1_b"])             # attn_out + LN1
        ff = dense(x, lp["wi"], lp["bi"], activation="gelu")   # (B*S, 3072)
        x = dense_res_ln(ff, lp["wo2"], lp["bo2"], x,
                         lp["ln2_g"], lp["ln2_b"])             # ffn_out + LN2

    # --- pooler + linear1 + linear2 + softmax(dim=0), fused ---
    cls_tok = x.reshape(B, S, HIDDEN)[:, 0, :]                 # (B, 768)
    out = pool_head(cls_tok, params["pool_w"], params["pool_b"],
                    params["w1"], params["b1"], params["w2"], params["b2"])
    # torch `.T`: pure layout transpose of (B, 1) -> (1, B), done in glue
    return out.T


# ----------------------------- main -----------------------------
if __name__ == "__main__":
    B, S = 2, 8
    key = jax.random.PRNGKey(0)
    pkey, ikey = jax.random.split(key)

    params = init_params(pkey)
    input_ids = jax.random.randint(ikey, (B, S), 0, VOCAB, dtype=jnp.int32)
    token_type_ids = jnp.zeros((B, S), jnp.int32)
    attention_mask = jnp.ones((B, S), jnp.int32).at[1, -1].set(0)

    out = riddle_forward(params, input_ids, token_type_ids, attention_mask)
    out = jax.block_until_ready(out)

    assert out.shape == (1, B), out.shape
    # softmax over dim=0 of a (B, 1) tensor must sum to 1
    assert abs(float(jnp.sum(out)) - 1.0) < 1e-4, out

    print("KERNEL_OK")
</pallas_src>

<mosaic_0001>
module attributes {stable_mosaic.version = 11 : i64} {
  func.func @_ln_kernel(%arg0: i32, %arg1: memref<16x768xf32, #tpu.memory_space<vmem>>, %arg2: memref<1x768xf32, #tpu.memory_space<vmem>>, %arg3: memref<1x768xf32, #tpu.memory_space<vmem>>, %arg4: memref<16x768xf32, #tpu.memory_space<vmem>>) attributes {dimension_semantics = [#tpu.dimension_semantics<arbitrary>], iteration_bounds = array<i64: 1>, scalar_prefetch = 0 : i64, scratch_operands = 0 : i64, tpu.core_type = #tpu.core_type<tc>, window_params = [{pipeline_mode = #tpu.pipeline_mode<synchronous>, transform_indices = @transform_0, window_bounds = array<i64: 16, 768>}, {pipeline_mode = #tpu.pipeline_mode<synchronous>, transform_indices = @transform_1, window_bounds = array<i64: 1, 768>}, {pipeline_mode = #tpu.pipeline_mode<synchronous>, transform_indices = @transform_2, window_bounds = array<i64: 1, 768>}, {pipeline_mode = #tpu.pipeline_mode<synchronous>, transform_indices = @transform_3, window_bounds = array<i64: 16, 768>}]} {
    %c0 = arith.constant 0 : index
    %c0_0 = arith.constant 0 : index
    %0 = vector.load %arg1[%c0, %c0_0] : memref<16x768xf32, #tpu.memory_space<vmem>>, vector<16x768xf32>
    %cst = arith.constant dense<0.000000e+00> : vector<16xf32>
    %1 = vector.multi_reduction <add>, %0, %cst [1] : vector<16x768xf32> to vector<16xf32>
    %2 = vector.shape_cast %1 : vector<16xf32> to vector<16x1xf32>
    %cst_1 = arith.constant 7.680000e+02 : f32
    %3 = vector.broadcast %cst_1 : f32 to vector<16x1xf32>
    %4 = arith.divf %2, %3 : vector<16x1xf32>
    %5 = vector.broadcast %4 : vector<16x1xf32> to vector<16x768xf32>
    %6 = arith.subf %0, %5 : vector<16x768xf32>
    %7 = vector.broadcast %4 : vector<16x1xf32> to vector<16x768xf32>
    %8 = arith.subf %0, %7 : vector<16x768xf32>
    %9 = arith.mulf %6, %8 : vector<16x768xf32>
    %cst_2 = arith.constant dense<0.000000e+00> : vector<16xf32>
    %10 = vector.multi_reduction <add>, %9, %cst_2 [1] : vector<16x768xf32> to vector<16xf32>
    %11 = vector.shape_cast %10 : vector<16xf32> to vector<16x1xf32>
    %cst_3 = arith.constant 7.680000e+02 : f32
    %12 = vector.broadcast %cst_3 : f32 to vector<16x1xf32>
    %13 = arith.divf %11, %12 : vector<16x1xf32>
    %14 = vector.broadcast %4 : vector<16x1xf32> to vector<16x768xf32>
    %15 = arith.subf %0, %14 : vector<16x768xf32>
    %cst_4 = arith.constant 9.99999996E-13 : f32
    %16 = vector.broadcast %cst_4 : f32 to vector<16x1xf32>
    %17 = arith.addf %13, %16 : vector<16x1xf32>
    %18 = math.rsqrt %17 : vector<16x1xf32>
    %19 = vector.broadcast %18 : vector<16x1xf32> to vector<16x768xf32>
    %20 = arith.mulf %15, %19 : vector<16x768xf32>
    %c0_5 = arith.constant 0 : index
    %c0_6 = arith.constant 0 : index
    %21 = vector.load %arg2[%c0_5, %c0_6] : memref<1x768xf32, #tpu.memory_space<vmem>>, vector<1x768xf32>
    %22 = vector.broadcast %21 : vector<1x768xf32> to vector<16x768xf32>
    %23 = arith.mulf %20, %22 : vector<16x768xf32>
    %c0_7 = arith.constant 0 : index
    %c0_8 = arith.constant 0 : index
    %24 = vector.load %arg3[%c0_7, %c0_8] : memref<1x768xf32, #tpu.memory_space<vmem>>, vector<1x768xf32>
    %25 = vector.broadcast %24 : vector<1x768xf32> to vector<16x768xf32>
    %26 = arith.addf %23, %25 : vector<16x768xf32>
    %c0_9 = arith.constant 0 : index
    %c0_10 = arith.constant 0 : index
    %27 = vector.load %arg4[%c0_9, %c0_10] : memref<16x768xf32, #tpu.memory_space<vmem>>, vector<16x768xf32>
    tpu.vector_store %arg4[%c0_9, %c0_10], %26 {strides = array<i32>} : memref<16x768xf32, #tpu.memory_space<vmem>>, vector<16x768xf32>,
    return
  }
  func.func @transform_0(%arg0: i32) -> (i32, i32) {
    %c0_i32 = arith.constant 0 : i32
    %c0_i32_0 = arith.constant 0 : i32
    %c0_i32_1 = arith.constant 0 : i32
    return %c0_i32, %c0_i32_0 : i32, i32
  }
  func.func @transform_1(%arg0: i32) -> (i32, i32) {
    %c0_i32 = arith.constant 0 : i32
    %c0_i32_0 = arith.constant 0 : i32
    %c0_i32_1 = arith.constant 0 : i32
    return %c0_i32, %c0_i32_0 : i32, i32
  }
  func.func @transform_2(%arg0: i32) -> (i32, i32) {
    %c0_i32 = arith.constant 0 : i32
    %c0_i32_0 = arith.constant 0 : i32
    %c0_i32_1 = arith.constant 0 : i32
    return %c0_i32, %c0_i32_0 : i32, i32
  }
  func.func @transform_3(%arg0: i32) -> (i32, i32) {
    %c0_i32 = arith.constant 0 : i32
    %c0_i32_0 = arith.constant 0 : i32
    %c0_i32_1 = arith.constant 0 : i32
    return %c0_i32, %c0_i32_0 : i32, i32
  }
}

</mosaic_0001>

<llo_original>
// kernel: tpu_custom_call.1
$region0: #{tpu_custom_call.1}
  #allocation0 [shape = 'u32[]', space=smem, size = 0x4, offset = 0x4, fixed_abs, tag = 'smem constant byte address 0x4 - core index']
  #allocation1 [shape = 'u32[144,128]{1,0:T(1,128)}', space=vmem, size = 0x12000, scoped, tag = 'internal scratch']
  %s0 = inlined_call_operand.hbm [shape: f32[16,768], index: 0, kind: input, shape index: {}]
  %s1 = inlined_call_operand.hbm [shape: f32[1,768], index: 1, kind: input, shape index: {}]
  %s2 = inlined_call_operand.vmem [shape: f32[1,768], index: 2, kind: input, shape index: {}]
  %s3 = inlined_call_operand.hbm [shape: f32[16,768], index: 3, kind: output, shape index: {}]
  %s4 = sld [smem:[#allocation0]]
  $region30: #{tpu_custom_call.1} parent=0
    _
  %s6 = ssub.s32 1, %s4
  %s7 = scalar_select 0, %s6, %s4
  $region1: #{tpu_custom_call.1} parent=0
    #allocation2 [shape = 'u8[49152]{0}', space=vmem, size = 0xc000, scoped, tag = 'input window, operand 0, single buffered']
    #allocation3 [shape = 's32[1]{0}', space=sflag, size = 0x4, scoped, tag = 'scoped memory for tpu_custom_call.1']
    #allocation4 [shape = 's32[1]{0}', space=sflag, size = 0x4, scoped, tag = 'scoped memory for tpu_custom_call.1']
    #allocation5 [shape = 'u8[3072]{0}', space=vmem, size = 0xc00, scoped, tag = 'input window, operand 1, single buffered']
    #allocation6 [shape = 's32[1]{0}', space=sflag, size = 0x4, scoped, tag = 'scoped memory for tpu_custom_call.1']
    #allocation7 [shape = 'u8[49152]{0}', space=vmem, size = 0xc000, scoped, tag = 'output window, operand 0, single buffered']
    %8 = vsyncpa [#allocation3], 0
    %9 = vsyncpa [#allocation6], 0
    %10 = vsyncpa [#allocation4], 0
    // Predicated region
    $region2: #{tpu_custom_call.1} parent=1 // pred_check
      _
    $region3: #{tpu_custom_call.1} parent=1 // pred_check_branch
      %12 = sbr.rel (0) target = $region5
    $region4: #{tpu_custom_call.1} parent=1 // pred_region
      %s14 = ssub.s32 1536, 1536
      %15 = vsyncadd [#allocation3], %s14
      %s16 = sshll.u32 [#allocation2], 4
      %s17 = int_to_ptr.vmem [resolvable:$true] %s16
      %22 = dma.hbm_to_vmem [thread:$0]  %s0, 1536, %s17, [#allocation3], 768, 768, 48
    $region5: #{tpu_custom_call.1} parent=1 // pred_fallthru
      _
    // Predicated region
    $region6: #{tpu_custom_call.1} parent=1 // pred_check
      _
    $region7: #{tpu_custom_call.1} parent=1 // pred_check_branch
      %24 = sbr.rel (0) target = $region9
    $region8: #{tpu_custom_call.1} parent=1 // pred_region
      %s26 = ssub.s32 96, 96
      %27 = vsyncadd [#allocation6], %s26
      %s29 = sshll.u32 [#allocation5], 4
      %s30 = int_to_ptr.vmem [resolvable:$true] %s29
      %32 = dma.hbm_to_vmem [thread:$0]  %s1, 96, %s30, [#allocation6]
    $region9: #{tpu_custom_call.1} parent=1 // pred_fallthru
      _
    // Predicated region
    $region10: #{tpu_custom_call.1} parent=1 // pred_check
      _
    $region11: #{tpu_custom_call.1} parent=1 // pred_check_branch
      %34 = sbr.rel (0) target = $region13
    $region12: #{tpu_custom_call.1} parent=1 // pred_region
      _
    $region13: #{tpu_custom_call.1} parent=1 // pred_fallthru
      _
    // Predicated region
    $region14: #{tpu_custom_call.1} parent=1 // pred_check
      _
    $region15: #{tpu_custom_call.1} parent=1 // pred_check_branch
      %36 = sbr.rel (0) target = $region17
    $region16: #{tpu_custom_call.1} parent=1 // pred_region
      %37 = dma.done [#allocation3], 1536
    $region17: #{tpu_custom_call.1} parent=1 // pred_fallthru
      _
    // Predicated region
    $region18: #{tpu_custom_call.1} parent=1 // pred_check
      _
    $region19: #{tpu_custom_call.1} parent=1 // pred_check_branch
      %39 = sbr.rel (0) target = $region21
    $region20: #{tpu_custom_call.1} parent=1 // pred_region
      %40 = dma.done [#allocation6], 96
    $region21: #{tpu_custom_call.1} parent=1 // pred_fallthru
      _
    %v41 = vld [vmem:[#allocation2] sm:$0xff]
    %v42 = vld [vmem:[#allocation2 + $0x8] sm:$0xff]
    %v43 = vld [vmem:[#allocation2 + $0x10] sm:$0xff]
    %v44 = vld [vmem:[#allocation2 + $0x18] sm:$0xff]
    %v45 = vld [vmem:[#allocation2 + $0x20] sm:$0xff]
    %v46 = vld [vmem:[#allocation2 + $0x28] sm:$0xff]
    %v47 = vld [vmem:[#allocation2 + $0x30] sm:$0xff]
    %v48 = vld [vmem:[#allocation2 + $0x38] sm:$0xff]
    %v49 = vld [vmem:[#allocation2 + $0x40] sm:$0xff]
    %v50 = vld [vmem:[#allocation2 + $0x48] sm:$0xff]
    %v51 = vld [vmem:[#allocation2 + $0x50] sm:$0xff]
    %v52 = vld [vmem:[#allocation2 + $0x58] sm:$0xff]
    %v53 = vadd.f32 %v41, %v42
    %v54 = vadd.f32 %v53, %v43
    %v55 = vadd.f32 %v54, %v44
    %v56 = vadd.f32 %v55, %v45
    %v57 = vadd.f32 %v56, %v46
    %58 = vadd.xlane.f32.xlu0 %v57
    %v59 = vpop.xlane.xlu0 %58
    %v60 = vadd.f32 %v47, %v48
    %v61 = vadd.f32 %v60, %v49
    %v62 = vadd.f32 %v61, %v50
    %v63 = vadd.f32 %v62, %v51
    %v64 = vadd.f32 %v63, %v52
    %65 = vadd.xlane.f32.xlu0 %v64
    %v66 = vpop.xlane.xlu0 %65
    %v67 = vrcp.pop 768.0
    %v68 = vmul.f32 %v59, %v67
    %v69 = vmul.f32 %v66, %v67
    %v70 = vsub.f32 %v41, %v68
    %v71 = vsub.f32 %v42, %v68
    %v72 = vsub.f32 %v43, %v68
    %v73 = vsub.f32 %v44, %v68
    %v74 = vsub.f32 %v45, %v68
    %v75 = vsub.f32 %v46, %v68
    %v76 = vsub.f32 %v47, %v69
    %v77 = vsub.f32 %v48, %v69
    %v78 = vsub.f32 %v49, %v69
    %v79 = vsub.f32 %v50, %v69
    %v80 = vsub.f32 %v51, %v69
    %v81 = vsub.f32 %v52, %v69
    %v82 = vmul.f32 %v70, %v70
    %v83 = vmul.f32 %v71, %v71
    %v84 = vmul.f32 %v72, %v72
    %v85 = vmul.f32 %v73, %v73
    %v86 = vmul.f32 %v74, %v74
    %v87 = vmul.f32 %v75, %v75
    %v88 = vmul.f32 %v76, %v76
    %v89 = vmul.f32 %v77, %v77
    %v90 = vmul.f32 %v78, %v78
    %v91 = vmul.f32 %v79, %v79
    %v92 = vmul.f32 %v80, %v80
    %v93 = vmul.f32 %v81, %v81
    %v94 = vadd.f32 %v82, %v83
    %v95 = vadd.f32 %v94, %v84
    %v96 = vadd.f32 %v95, %v85
    %v97 = vadd.f32 %v96, %v86
    %v98 = vadd.f32 %v97, %v87
    %99 = vadd.xlane.f32.xlu0 %v98
    %v100 = vpop.xlane.xlu0 %99
    %v101 = vadd.f32 %v88, %v89
    %v102 = vadd.f32 %v101, %v90
    %v103 = vadd.f32 %v102, %v91
    %v104 = vadd.f32 %v103, %v92
    %v105 = vadd.f32 %v104, %v93
    %106 = vadd.xlane.f32.xlu0 %v105
    %v107 = vpop.xlane.xlu0 %106
    %v108 = vmul.f32 %v100, %v67
    %v109 = vmul.f32 %v107, %v67
    %v110 = vadd.f32 %v108, 1e-12
    %v111 = vadd.f32 %v109, 1e-12
    %v112 = vrsqrt.pop %v110
    %v113 = vrsqrt.pop %v111
    %v114 = vmul.f32 %v70, %v112
    %v115 = vmul.f32 %v71, %v112
    %v116 = vmul.f32 %v72, %v112
    %v117 = vmul.f32 %v73, %v112
    %v118 = vmul.f32 %v74, %v112
    %v119 = vmul.f32 %v75, %v112
    %v120 = vmul.f32 %v76, %v113
    %v121 = vmul.f32 %v77, %v113
    %v122 = vmul.f32 %v78, %v113
    %v123 = vmul.f32 %v79, %v113
    %v124 = vmul.f32 %v80, %v113
    %v125 = vmul.f32 %v81, %v113
    %v126 = vld [vmem:[#allocation5] sm:$0x3f]
    %v128 = vlaneseq
    %v129 = vshrl.u32 %v128, 7
    %v130 = vsub.s32 0, %v129
    %v131 = vrot.slane %v126, %v130
    %v132 = vlaneseq
    %v133 = vshrl.u32 %v132, 7
    %v134 = vsub.s32 1, %v133
    %v135 = vrot.slane %v126, %v134
    %v136 = vlaneseq
    %v137 = vshrl.u32 %v136, 7
    %v138 = vsub.s32 2, %v137
    %v139 = vrot.slane %v126, %v138
    %v140 = vlaneseq
    %v141 = vshrl.u32 %v140, 7
    %v142 = vsub.s32 3, %v141
    %v143 = vrot.slane %v126, %v142
    %v144 = vlaneseq
    %v145 = vshrl.u32 %v144, 7
    %v146 = vsub.s32 4, %v145
    %v147 = vrot.slane %v126, %v146
    %v148 = vlaneseq
    %v149 = vshrl.u32 %v148, 7
    %v150 = vsub.s32 5, %v149
    %v151 = vrot.slane %v126, %v150
    %v158 = vmul.f32 %v114, %v131
    %v159 = vmul.f32 %v115, %v135
    %v160 = vmul.f32 %v116, %v139
    %v161 = vmul.f32 %v117, %v143
    %v162 = vmul.f32 %v118, %v147
    %v163 = vmul.f32 %v119, %v151
    %v164 = vmul.f32 %v120, %v131
    %v165 = vmul.f32 %v121, %v135
    %v166 = vmul.f32 %v122, %v139
    %v167 = vmul.f32 %v123, %v143
    %v168 = vmul.f32 %v124, %v147
    %v169 = vmul.f32 %v125, %v151
    %v170 = vld [vmem:[%s2] sm:$0x3f]
    %v172 = vlaneseq
    %v173 = vshrl.u32 %v172, 7
    %v174 = vsub.s32 0, %v173
    %v175 = vrot.slane %v170, %v174
    %v176 = vlaneseq
    %v177 = vshrl.u32 %v176, 7
    %v178 = vsub.s32 1, %v177
    %v179 = vrot.slane %v170, %v178
    %v180 = vlaneseq
    %v181 = vshrl.u32 %v180, 7
    %v182 = vsub.s32 2, %v181
    %v183 = vrot.slane %v170, %v182
    %v184 = vlaneseq
    %v185 = vshrl.u32 %v184, 7
    %v186 = vsub.s32 3, %v185
    %v187 = vrot.slane %v170, %v186
    %v188 = vlaneseq
    %v189 = vshrl.u32 %v188, 7
    %v190 = vsub.s32 4, %v189
    %v191 = vrot.slane %v170, %v190
    %v192 = vlaneseq
    %v193 = vshrl.u32 %v192, 7
    %v194 = vsub.s32 5, %v193
    %v195 = vrot.slane %v170, %v194
    %v202 = vadd.f32 %v158, %v175
    %v203 = vadd.f32 %v159, %v179
    %v204 = vadd.f32 %v160, %v183
    %v205 = vadd.f32 %v161, %v187
    %v206 = vadd.f32 %v162, %v191
    %v207 = vadd.f32 %v163, %v195
    %v208 = vadd.f32 %v164, %v175
    %v209 = vadd.f32 %v165, %v179
    %v210 = vadd.f32 %v166, %v183
    %v211 = vadd.f32 %v167, %v187
    %v212 = vadd.f32 %v168, %v191
    %v213 = vadd.f32 %v169, %v195
    %214 = vst [vmem:[#allocation7] sm:$0xff] %v202
    %215 = vst [vmem:[#allocation7 + $0x8] sm:$0xff] %v203
    %216 = vst [vmem:[#allocation7 + $0x10] sm:$0xff] %v204
    %217 = vst [vmem:[#allocation7 + $0x18] sm:$0xff] %v205
    %218 = vst [vmem:[#allocation7 + $0x20] sm:$0xff] %v206
    %219 = vst [vmem:[#allocation7 + $0x28] sm:$0xff] %v207
    %220 = vst [vmem:[#allocation7 + $0x30] sm:$0xff] %v208
    %221 = vst [vmem:[#allocation7 + $0x38] sm:$0xff] %v209
    %222 = vst [vmem:[#allocation7 + $0x40] sm:$0xff] %v210
    %223 = vst [vmem:[#allocation7 + $0x48] sm:$0xff] %v211
    %224 = vst [vmem:[#allocation7 + $0x50] sm:$0xff] %v212
    %225 = vst [vmem:[#allocation7 + $0x58] sm:$0xff] %v213
    // Predicated region
    $region22: #{tpu_custom_call.1} parent=1 // pred_check
      _
    $region23: #{tpu_custom_call.1} parent=1 // pred_check_branch
      %227 = sbr.rel (0) target = $region25
    $region24: #{tpu_custom_call.1} parent=1 // pred_region
      %s229 = ssub.s32 1536, 1536
      %230 = vsyncadd [#allocation4], %s229
      %s231 = sshll.u32 [#allocation7], 4
      %s232 = int_to_ptr.vmem [resolvable:$true] %s231
      %237 = dma.vmem_to_hbm [thread:$0]  %s232, 1536, %s3, [#allocation4], 768, 768, 48
    $region25: #{tpu_custom_call.1} parent=1 // pred_fallthru
      _
    // Predicated region
    $region26: #{tpu_custom_call.1} parent=1 // pred_check
      _
    $region27: #{tpu_custom_call.1} parent=1 // pred_check_branch
      %239 = sbr.rel (0) target = $region29
    $region28: #{tpu_custom_call.1} parent=1 // pred_region
      %240 = dma.done [#allocation4], 1536
    $region29: #{tpu_custom_call.1} parent=1 // pred_fallthru
      _
    %241 = vsyncpa [#allocation3], 1
    %242 = vsyncpa [#allocation6], 1
    %243 = vsyncpa [#allocation4], 1

</llo_original>
